<compile_context>
chip_gen: v7x
topology: tpu7x:2x2x1
jax: 0.10.0
libtpu: 0.0.40
codegen_flags: <defaults>
</compile_context>

<pallas_src>
import functools

import jax
import jax.numpy as jnp
from jax import lax
from jax.experimental import pallas as pl
from jax.experimental.pallas import tpu as pltpu


# ----------------------------------------------------------------------------- kernel
def _basic_block_kernel(x_ref, sdn_ref, sup_ref, m1_ref, s1_ref, b1_ref,
                        m2_ref, s2_ref, b2_ref, o_ref):
    """One block of NB images (RB = NB*H rows) per grid step.

    x_ref:   (RB, W*Cin)        f32   lane-dense rows (one image scanline per row)
    sdn/sup: (RB, RB)           bf16  0/1 row-shift matrices (conv height padding and
                                      image boundaries inside the row block baked in)
    m1_ref:  (3, W*Cin, W*Cout) bf16  conv1 tap matrices (kw taps + width padding folded)
    m2_ref:  (3, W*Cout, W*Cout) bf16 conv2 tap matrices
    s*/b*:   (1, W*Cout)        f32   folded BatchNorm scale / bias (tiled over W)
    o_ref:   (RB, W*Cout)       f32
    """
    f32 = jnp.float32
    x = x_ref[...]                       # f32, kept for the exact residual
    xb = x.astype(jnp.bfloat16)
    sdn = sdn_ref[...]
    sup = sup_ref[...]

    def conv3x3(a, m_ref):
        # a_dn[h] = a[h-1], a_up[h] = a[h+1] (zero at image borders) via 0/1 matmuls.
        a_dn = jnp.dot(sdn, a, preferred_element_type=f32).astype(a.dtype)
        a_up = jnp.dot(sup, a, preferred_element_type=f32).astype(a.dtype)
        return (jnp.dot(a_dn, m_ref[0], preferred_element_type=f32) +
                jnp.dot(a,    m_ref[1], preferred_element_type=f32) +
                jnp.dot(a_up, m_ref[2], preferred_element_type=f32))

    # conv1 -> bn1 (folded) -> relu
    out1 = jnp.maximum(conv3x3(xb, m1_ref) * s1_ref[...] + b1_ref[...], 0.0)
    # conv2 -> bn2 (folded) -> +residual -> relu
    out2 = conv3x3(out1.astype(jnp.bfloat16), m2_ref) * s2_ref[...] + b2_ref[...]
    o_ref[...] = jnp.maximum(out2 + x, 0.0).astype(o_ref.dtype)


# ----------------------------------------------------------------------------- wrapper helpers
def _conv_tap_matrices(w_oihw, W):
    """Fold a 3x3 conv weight (OIHW) into 3 block-banded (W*Cin, W*Cout) matrices.

    M[kh, wi*Cin + ci, wo*Cout + co] = w[co, ci, kh, wi - wo + 1] when 0 <= wi-wo+1 <= 2,
    else 0 — i.e. the kw taps and the width zero-padding are baked into the matrix.
    """
    Cout, Cin, KH, KW = w_oihw.shape
    assert KH == 3 and KW == 3
    wt = jnp.transpose(w_oihw, (2, 3, 1, 0))              # (kh, kw, Cin, Cout)
    wi = jnp.arange(W)
    wo = jnp.arange(W)
    kw = wi[:, None] - wo[None, :] + 1                    # (W_in, W_out)
    valid = (kw >= 0) & (kw <= 2)
    taps = wt[:, jnp.clip(kw, 0, 2), :, :]                # (3, W, W, Cin, Cout)
    taps = jnp.where(valid[None, :, :, None, None], taps, 0.0)
    m = jnp.transpose(taps, (0, 1, 3, 2, 4)).reshape(3, W * Cin, W * Cout)
    return m


def _row_shift_matrices(RB, H, dtype):
    """0/1 matrices s.t. (S_dn @ Y)[h] = Y[h-1], (S_up @ Y)[h] = Y[h+1], zero across images."""
    r = jnp.arange(RB)
    first = (r % H) == 0
    last = (r % H) == (H - 1)
    sdn = (((r[:, None] - 1) == r[None, :]) & (~first)[:, None]).astype(dtype)
    sup = (((r[:, None] + 1) == r[None, :]) & (~last)[:, None]).astype(dtype)
    return sdn, sup


def _fold_bn_tiled(gamma, beta, mean, var, W, eps=1e-5):
    scale = (gamma / jnp.sqrt(var + eps)).astype(jnp.float32)
    bias = (beta - mean * scale).astype(jnp.float32)
    return jnp.tile(scale, W)[None, :], jnp.tile(bias, W)[None, :]


def _images_per_step(N, H):
    """Fold as many images as fit ~256 rows per grid step (keeps shift matrices tiny)."""
    nb = max(1, min(N, max(1, 256 // max(H, 1))))
    while N % nb != 0:
        nb -= 1
    if nb < N and (nb * H) % 8 != 0:
        nb = N  # fall back to one block == full array so the (8,128) rule is trivially met
    return nb


# ----------------------------------------------------------------------------- entry point
@jax.jit
def basic_block_pallas(x_nchw, params):
    N, Cin, H, W = x_nchw.shape
    Cout = params["w1"].shape[0]
    assert Cin == Cout, "downsample=None path requires inplanes == planes"
    WC_in, WC_out = W * Cin, W * Cout
    # Tap-matrix strategy is sized for small W*C feature maps (fits VMEM comfortably).
    assert 3 * (WC_in + WC_out) * WC_out * 2 < (16 << 20)

    NB = _images_per_step(N, H)
    RB = NB * H
    grid = (N // NB,)

    # NCHW -> lane-dense rows (N*H, W*Cin); no padding anywhere (folded into weights/shifts).
    x_rows = jnp.transpose(x_nchw, (0, 2, 3, 1)).reshape(N * H, WC_in).astype(jnp.float32)

    m1 = _conv_tap_matrices(params["w1"], W).astype(jnp.bfloat16)   # (3, WC_in, WC_out)
    m2 = _conv_tap_matrices(params["w2"], W).astype(jnp.bfloat16)   # (3, WC_out, WC_out)
    sdn, sup = _row_shift_matrices(RB, H, jnp.bfloat16)             # (RB, RB)
    s1, b1 = _fold_bn_tiled(params["bn1_gamma"], params["bn1_beta"],
                            params["bn1_mean"], params["bn1_var"], W)
    s2, b2 = _fold_bn_tiled(params["bn2_gamma"], params["bn2_beta"],
                            params["bn2_mean"], params["bn2_var"], W)

    flops = int(2 * (2 * 9 * H * W * Cin * Cout) * N            # the two 3x3 convs
                + 2 * 2 * 2 * RB * RB * max(WC_in, WC_out) * (N // NB))  # shift matmuls
    bytes_accessed = int(x_rows.size * 4 + N * H * WC_out * 4
                         + m1.size * 2 + m2.size * 2 + 2 * RB * RB * 2
                         + 4 * WC_out * 4)

    out_rows = pl.pallas_call(
        _basic_block_kernel,
        out_shape=jax.ShapeDtypeStruct((N * H, WC_out), jnp.float32),
        grid_spec=pltpu.PrefetchScalarGridSpec(
            num_scalar_prefetch=0,
            grid=grid,
            in_specs=[
                pl.BlockSpec((RB, WC_in), lambda i: (i, 0)),
                pl.BlockSpec((RB, RB), lambda i: (0, 0)),
                pl.BlockSpec((RB, RB), lambda i: (0, 0)),
                pl.BlockSpec((3, WC_in, WC_out), lambda i: (0, 0, 0)),
                pl.BlockSpec((1, WC_out), lambda i: (0, 0)),
                pl.BlockSpec((1, WC_out), lambda i: (0, 0)),
                pl.BlockSpec((3, WC_out, WC_out), lambda i: (0, 0, 0)),
                pl.BlockSpec((1, WC_out), lambda i: (0, 0)),
                pl.BlockSpec((1, WC_out), lambda i: (0, 0)),
            ],
            out_specs=pl.BlockSpec((RB, WC_out), lambda i: (i, 0)),
        ),
        compiler_params=pltpu.CompilerParams(dimension_semantics=("parallel",)),
        cost_estimate=pl.CostEstimate(flops=flops, transcendentals=0,
                                      bytes_accessed=bytes_accessed),
    )(x_rows, sdn, sup, m1, s1, b1, m2, s2, b2)

    # rows -> NHWC -> NCHW
    return jnp.transpose(out_rows.reshape(N, H, W, Cout), (0, 3, 1, 2))


# ----------------------------------------------------------------------------- reference + test
def basic_block_ref(x, params, eps=1e-5):
    """Pure-JAX f32 reference (matches PyTorch BasicBlock forward, eval-mode BN)."""
    dn = ("NCHW", "OIHW", "NCHW")

    def bn(y, g, b, m, v):
        g = g.reshape(1, -1, 1, 1); b = b.reshape(1, -1, 1, 1)
        m = m.reshape(1, -1, 1, 1); v = v.reshape(1, -1, 1, 1)
        return g * (y - m) / jnp.sqrt(v + eps) + b

    out = lax.conv_general_dilated(x, params["w1"], (1, 1), ((1, 1), (1, 1)),
                                   dimension_numbers=dn)
    out = jnp.maximum(bn(out, params["bn1_gamma"], params["bn1_beta"],
                         params["bn1_mean"], params["bn1_var"]), 0.0)
    out = lax.conv_general_dilated(out, params["w2"], (1, 1), ((1, 1), (1, 1)),
                                   dimension_numbers=dn)
    out = bn(out, params["bn2_gamma"], params["bn2_beta"],
             params["bn2_mean"], params["bn2_var"])
    return jnp.maximum(out + x, 0.0)


def make_params(key, inplanes, planes):
    ks = jax.random.split(key, 10)
    return {
        "w1": 0.1 * jax.random.normal(ks[0], (planes, inplanes, 3, 3), jnp.float32),
        "w2": 0.1 * jax.random.normal(ks[1], (planes, planes, 3, 3), jnp.float32),
        "bn1_gamma": 1.0 + 0.1 * jax.random.normal(ks[2], (planes,), jnp.float32),
        "bn1_beta": 0.1 * jax.random.normal(ks[3], (planes,), jnp.float32),
        "bn1_mean": 0.1 * jax.random.normal(ks[4], (planes,), jnp.float32),
        "bn1_var": jnp.abs(1.0 + 0.1 * jax.random.normal(ks[5], (planes,), jnp.float32)),
        "bn2_gamma": 1.0 + 0.1 * jax.random.normal(ks[6], (planes,), jnp.float32),
        "bn2_beta": 0.1 * jax.random.normal(ks[7], (planes,), jnp.float32),
        "bn2_mean": 0.1 * jax.random.normal(ks[8], (planes,), jnp.float32),
        "bn2_var": jnp.abs(1.0 + 0.1 * jax.random.normal(ks[9], (planes,), jnp.float32)),
    }


if __name__ == "__main__":
    key = jax.random.PRNGKey(0)
    kx, kp = jax.random.split(key)

    N, C, H, W = 2, 8, 16, 16          # inplanes == planes == 8, stride=1, downsample=None
    x = jax.random.normal(kx, (N, C, H, W), jnp.float32)
    params = make_params(kp, C, C)

    out = jax.block_until_ready(basic_block_pallas(x, params))
    ref = basic_block_ref(x, params)

    assert out.shape == ref.shape == (N, C, H, W)
    # bf16 matmul operands (f32 accumulation / f32 elementwise & residual) -> ~1e-2 scale error.
    assert jnp.allclose(out, ref, rtol=5e-2, atol=5e-2), (
        f"max abs err {jnp.max(jnp.abs(out - ref))}")

    print("KERNEL_OK")
</pallas_src>

<mosaic_0001>
module attributes {stable_mosaic.version = 11 : i64} {
  func.func @_basic_block_kernel(%arg0: i32, %arg1: memref<32x128xf32, #tpu.memory_space<vmem>>, %arg2: memref<32x32xbf16, #tpu.memory_space<vmem>>, %arg3: memref<32x32xbf16, #tpu.memory_space<vmem>>, %arg4: memref<3x128x128xbf16, #tpu.memory_space<vmem>>, %arg5: memref<1x128xf32, #tpu.memory_space<vmem>>, %arg6: memref<1x128xf32, #tpu.memory_space<vmem>>, %arg7: memref<3x128x128xbf16, #tpu.memory_space<vmem>>, %arg8: memref<1x128xf32, #tpu.memory_space<vmem>>, %arg9: memref<1x128xf32, #tpu.memory_space<vmem>>, %arg10: memref<32x128xf32, #tpu.memory_space<vmem>>) attributes {dimension_semantics = [#tpu.dimension_semantics<parallel>], iteration_bounds = array<i64: 1>, scalar_prefetch = 0 : i64, scratch_operands = 0 : i64, tpu.core_type = #tpu.core_type<tc>, window_params = [{transform_indices = @transform_0, window_bounds = array<i64: 32, 128>}, {pipeline_mode = #tpu.pipeline_mode<synchronous>, transform_indices = @transform_1, window_bounds = array<i64: 32, 32>}, {pipeline_mode = #tpu.pipeline_mode<synchronous>, transform_indices = @transform_2, window_bounds = array<i64: 32, 32>}, {pipeline_mode = #tpu.pipeline_mode<synchronous>, transform_indices = @transform_3, window_bounds = array<i64: 3, 128, 128>}, {pipeline_mode = #tpu.pipeline_mode<synchronous>, transform_indices = @transform_4, window_bounds = array<i64: 1, 128>}, {pipeline_mode = #tpu.pipeline_mode<synchronous>, transform_indices = @transform_5, window_bounds = array<i64: 1, 128>}, {pipeline_mode = #tpu.pipeline_mode<synchronous>, transform_indices = @transform_6, window_bounds = array<i64: 3, 128, 128>}, {pipeline_mode = #tpu.pipeline_mode<synchronous>, transform_indices = @transform_7, window_bounds = array<i64: 1, 128>}, {pipeline_mode = #tpu.pipeline_mode<synchronous>, transform_indices = @transform_8, window_bounds = array<i64: 1, 128>}, {transform_indices = @transform_9, window_bounds = array<i64: 32, 128>}]} {
    %c0 = arith.constant 0 : index
    %c0_0 = arith.constant 0 : index
    %0 = vector.load %arg1[%c0, %c0_0] : memref<32x128xf32, #tpu.memory_space<vmem>>, vector<32x128xf32>
    %1 = arith.truncf %0 : vector<32x128xf32> to vector<32x128xbf16>
    %c0_1 = arith.constant 0 : index
    %c0_2 = arith.constant 0 : index
    %2 = vector.load %arg2[%c0_1, %c0_2] : memref<32x32xbf16, #tpu.memory_space<vmem>>, vector<32x32xbf16>
    %c0_3 = arith.constant 0 : index
    %c0_4 = arith.constant 0 : index
    %3 = vector.load %arg3[%c0_3, %c0_4] : memref<32x32xbf16, #tpu.memory_space<vmem>>, vector<32x32xbf16>
    %cst = arith.constant dense<0.000000e+00> : vector<32x128xf32>
    %4 = tpu.matmul %2, %1, %cst {dimension_numbers = #tpu.dot_dimension_numbers<[1], [0], [0], [1], [0, 0, 1, 1], [], []>} : vector<32x32xbf16>, vector<32x128xbf16>, vector<32x128xf32> -> vector<32x128xf32>
    %5 = arith.truncf %4 : vector<32x128xf32> to vector<32x128xbf16>
    %cst_5 = arith.constant dense<0.000000e+00> : vector<32x128xf32>
    %6 = tpu.matmul %3, %1, %cst_5 {dimension_numbers = #tpu.dot_dimension_numbers<[1], [0], [0], [1], [0, 0, 1, 1], [], []>} : vector<32x32xbf16>, vector<32x128xbf16>, vector<32x128xf32> -> vector<32x128xf32>
    %7 = arith.truncf %6 : vector<32x128xf32> to vector<32x128xbf16>
    %c0_6 = arith.constant 0 : index
    %c0_7 = arith.constant 0 : index
    %c0_8 = arith.constant 0 : index
    %8 = vector.load %arg4[%c0_6, %c0_7, %c0_8] : memref<3x128x128xbf16, #tpu.memory_space<vmem>>, vector<1x128x128xbf16>
    %9 = vector.shape_cast %8 : vector<1x128x128xbf16> to vector<128x128xbf16>
    %cst_9 = arith.constant dense<0.000000e+00> : vector<32x128xf32>
    %10 = tpu.matmul %5, %9, %cst_9 {dimension_numbers = #tpu.dot_dimension_numbers<[1], [0], [0], [1], [0, 0, 1, 1], [], []>} : vector<32x128xbf16>, vector<128x128xbf16>, vector<32x128xf32> -> vector<32x128xf32>
    %c1 = arith.constant 1 : index
    %c0_10 = arith.constant 0 : index
    %c0_11 = arith.constant 0 : index
    %11 = vector.load %arg4[%c1, %c0_10, %c0_11] : memref<3x128x128xbf16, #tpu.memory_space<vmem>>, vector<1x128x128xbf16>
    %12 = vector.shape_cast %11 : vector<1x128x128xbf16> to vector<128x128xbf16>
    %cst_12 = arith.constant dense<0.000000e+00> : vector<32x128xf32>
    %13 = tpu.matmul %1, %12, %cst_12 {dimension_numbers = #tpu.dot_dimension_numbers<[1], [0], [0], [1], [0, 0, 1, 1], [], []>} : vector<32x128xbf16>, vector<128x128xbf16>, vector<32x128xf32> -> vector<32x128xf32>
    %14 = arith.addf %10, %13 : vector<32x128xf32>
    %c2 = arith.constant 2 : index
    %c0_13 = arith.constant 0 : index
    %c0_14 = arith.constant 0 : index
    %15 = vector.load %arg4[%c2, %c0_13, %c0_14] : memref<3x128x128xbf16, #tpu.memory_space<vmem>>, vector<1x128x128xbf16>
    %16 = vector.shape_cast %15 : vector<1x128x128xbf16> to vector<128x128xbf16>
    %cst_15 = arith.constant dense<0.000000e+00> : vector<32x128xf32>
    %17 = tpu.matmul %7, %16, %cst_15 {dimension_numbers = #tpu.dot_dimension_numbers<[1], [0], [0], [1], [0, 0, 1, 1], [], []>} : vector<32x128xbf16>, vector<128x128xbf16>, vector<32x128xf32> -> vector<32x128xf32>
    %18 = arith.addf %14, %17 : vector<32x128xf32>
    %c0_16 = arith.constant 0 : index
    %c0_17 = arith.constant 0 : index
    %19 = vector.load %arg5[%c0_16, %c0_17] : memref<1x128xf32, #tpu.memory_space<vmem>>, vector<1x128xf32>
    %20 = vector.broadcast %19 : vector<1x128xf32> to vector<32x128xf32>
    %21 = arith.mulf %18, %20 : vector<32x128xf32>
    %c0_18 = arith.constant 0 : index
    %c0_19 = arith.constant 0 : index
    %22 = vector.load %arg6[%c0_18, %c0_19] : memref<1x128xf32, #tpu.memory_space<vmem>>, vector<1x128xf32>
    %23 = vector.broadcast %22 : vector<1x128xf32> to vector<32x128xf32>
    %24 = arith.addf %21, %23 : vector<32x128xf32>
    %cst_20 = arith.constant 0.000000e+00 : f32
    %25 = vector.broadcast %cst_20 : f32 to vector<32x128xf32>
    %26 = arith.maximumf %24, %25 : vector<32x128xf32>
    %27 = arith.truncf %26 : vector<32x128xf32> to vector<32x128xbf16>
    %cst_21 = arith.constant dense<0.000000e+00> : vector<32x128xf32>
    %28 = tpu.matmul %2, %27, %cst_21 {dimension_numbers = #tpu.dot_dimension_numbers<[1], [0], [0], [1], [0, 0, 1, 1], [], []>} : vector<32x32xbf16>, vector<32x128xbf16>, vector<32x128xf32> -> vector<32x128xf32>
    %29 = arith.truncf %28 : vector<32x128xf32> to vector<32x128xbf16>
    %cst_22 = arith.constant dense<0.000000e+00> : vector<32x128xf32>
    %30 = tpu.matmul %3, %27, %cst_22 {dimension_numbers = #tpu.dot_dimension_numbers<[1], [0], [0], [1], [0, 0, 1, 1], [], []>} : vector<32x32xbf16>, vector<32x128xbf16>, vector<32x128xf32> -> vector<32x128xf32>
    %31 = arith.truncf %30 : vector<32x128xf32> to vector<32x128xbf16>
    %c0_23 = arith.constant 0 : index
    %c0_24 = arith.constant 0 : index
    %c0_25 = arith.constant 0 : index
    %32 = vector.load %arg7[%c0_23, %c0_24, %c0_25] : memref<3x128x128xbf16, #tpu.memory_space<vmem>>, vector<1x128x128xbf16>
    %33 = vector.shape_cast %32 : vector<1x128x128xbf16> to vector<128x128xbf16>
    %cst_26 = arith.constant dense<0.000000e+00> : vector<32x128xf32>
    %34 = tpu.matmul %29, %33, %cst_26 {dimension_numbers = #tpu.dot_dimension_numbers<[1], [0], [0], [1], [0, 0, 1, 1], [], []>} : vector<32x128xbf16>, vector<128x128xbf16>, vector<32x128xf32> -> vector<32x128xf32>
    %c1_27 = arith.constant 1 : index
    %c0_28 = arith.constant 0 : index
    %c0_29 = arith.constant 0 : index
    %35 = vector.load %arg7[%c1_27, %c0_28, %c0_29] : memref<3x128x128xbf16, #tpu.memory_space<vmem>>, vector<1x128x128xbf16>
    %36 = vector.shape_cast %35 : vector<1x128x128xbf16> to vector<128x128xbf16>
    %cst_30 = arith.constant dense<0.000000e+00> : vector<32x128xf32>
    %37 = tpu.matmul %27, %36, %cst_30 {dimension_numbers = #tpu.dot_dimension_numbers<[1], [0], [0], [1], [0, 0, 1, 1], [], []>} : vector<32x128xbf16>, vector<128x128xbf16>, vector<32x128xf32> -> vector<32x128xf32>
    %38 = arith.addf %34, %37 : vector<32x128xf32>
    %c2_31 = arith.constant 2 : index
    %c0_32 = arith.constant 0 : index
    %c0_33 = arith.constant 0 : index
    %39 = vector.load %arg7[%c2_31, %c0_32, %c0_33] : memref<3x128x128xbf16, #tpu.memory_space<vmem>>, vector<1x128x128xbf16>
    %40 = vector.shape_cast %39 : vector<1x128x128xbf16> to vector<128x128xbf16>
    %cst_34 = arith.constant dense<0.000000e+00> : vector<32x128xf32>
    %41 = tpu.matmul %31, %40, %cst_34 {dimension_numbers = #tpu.dot_dimension_numbers<[1], [0], [0], [1], [0, 0, 1, 1], [], []>} : vector<32x128xbf16>, vector<128x128xbf16>, vector<32x128xf32> -> vector<32x128xf32>
    %42 = arith.addf %38, %41 : vector<32x128xf32>
    %c0_35 = arith.constant 0 : index
    %c0_36 = arith.constant 0 : index
    %43 = vector.load %arg8[%c0_35, %c0_36] : memref<1x128xf32, #tpu.memory_space<vmem>>, vector<1x128xf32>
    %44 = vector.broadcast %43 : vector<1x128xf32> to vector<32x128xf32>
    %45 = arith.mulf %42, %44 : vector<32x128xf32>
    %c0_37 = arith.constant 0 : index
    %c0_38 = arith.constant 0 : index
    %46 = vector.load %arg9[%c0_37, %c0_38] : memref<1x128xf32, #tpu.memory_space<vmem>>, vector<1x128xf32>
    %47 = vector.broadcast %46 : vector<1x128xf32> to vector<32x128xf32>
    %48 = arith.addf %45, %47 : vector<32x128xf32>
    %49 = arith.addf %48, %0 : vector<32x128xf32>
    %cst_39 = arith.constant 0.000000e+00 : f32
    %50 = vector.broadcast %cst_39 : f32 to vector<32x128xf32>
    %51 = arith.maximumf %49, %50 : vector<32x128xf32>
    %c0_40 = arith.constant 0 : index
    %c0_41 = arith.constant 0 : index
    %52 = vector.load %arg10[%c0_40, %c0_41] : memref<32x128xf32, #tpu.memory_space<vmem>>, vector<32x128xf32>
    tpu.vector_store %arg10[%c0_40, %c0_41], %51 {strides = array<i32>} : memref<32x128xf32, #tpu.memory_space<vmem>>, vector<32x128xf32>,
    return
  }
  func.func @transform_0(%arg0: i32) -> (i32, i32) {
    %c0_i32 = arith.constant 0 : i32
    %c0_i32_0 = arith.constant 0 : i32
    return %arg0, %c0_i32 : i32, i32
  }
  func.func @transform_1(%arg0: i32) -> (i32, i32) {
    %c0_i32 = arith.constant 0 : i32
    %c0_i32_0 = arith.constant 0 : i32
    %c0_i32_1 = arith.constant 0 : i32
    return %c0_i32, %c0_i32_0 : i32, i32
  }
  func.func @transform_2(%arg0: i32) -> (i32, i32) {
    %c0_i32 = arith.constant 0 : i32
    %c0_i32_0 = arith.constant 0 : i32
    %c0_i32_1 = arith.constant 0 : i32
    return %c0_i32, %c0_i32_0 : i32, i32
  }
  func.func @transform_3(%arg0: i32) -> (i32, i32, i32) {
    %c0_i32 = arith.constant 0 : i32
    %c0_i32_0 = arith.constant 0 : i32
    %c0_i32_1 = arith.constant 0 : i32
    %c0_i32_2 = arith.constant 0 : i32
    return %c0_i32, %c0_i32_0, %c0_i32_1 : i32, i32, i32
  }
  func.func @transform_4(%arg0: i32) -> (i32, i32) {
    %c0_i32 = arith.constant 0 : i32
    %c0_i32_0 = arith.constant 0 : i32
    %c0_i32_1 = arith.constant 0 : i32
    return %c0_i32, %c0_i32_0 : i32, i32
  }
  func.func @transform_5(%arg0: i32) -> (i32, i32) {
    %c0_i32 = arith.constant 0 : i32
    %c0_i32_0 = arith.constant 0 : i32
    %c0_i32_1 = arith.constant 0 : i32
    return %c0_i32, %c0_i32_0 : i32, i32
  }
  func.func @transform_6(%arg0: i32) -> (i32, i32, i32) {
    %c0_i32 = arith.constant 0 : i32
    %c0_i32_0 = arith.constant 0 : i32
    %c0_i32_1 = arith.constant 0 : i32
    %c0_i32_2 = arith.constant 0 : i32
    return %c0_i32, %c0_i32_0, %c0_i32_1 : i32, i32, i32
  }
  func.func @transform_7(%arg0: i32) -> (i32, i32) {
    %c0_i32 = arith.constant 0 : i32
    %c0_i32_0 = arith.constant 0 : i32
    %c0_i32_1 = arith.constant 0 : i32
    return %c0_i32, %c0_i32_0 : i32, i32
  }
  func.func @transform_8(%arg0: i32) -> (i32, i32) {
    %c0_i32 = arith.constant 0 : i32
    %c0_i32_0 = arith.constant 0 : i32
    %c0_i32_1 = arith.constant 0 : i32
    return %c0_i32, %c0_i32_0 : i32, i32
  }
  func.func @transform_9(%arg0: i32) -> (i32, i32) {
    %c0_i32 = arith.constant 0 : i32
    %c0_i32_0 = arith.constant 0 : i32
    return %arg0, %c0_i32 : i32, i32
  }
}

</mosaic_0001>

<llo_original>
// kernel: tile.23
$region0: #{tile.23}
  #allocation0 [shape = 's32[1]{0}', space=sflag, size = 0x4, scoped, tag = 'scoped memory for tile.23']
  %s0 = inlined_call_operand.vmem [shape: f32[8], index: 0, kind: input, shape index: {}]
  %s1 = inlined_call_operand.vmem [shape: f32[16,8], index: 1, kind: output, shape index: {}]
  // Predicated region
  $region2: #{tile.23} parent=0 // pred_check
    _
  $region3: #{tile.23} parent=0 // pred_check_branch
    %3 = sbr.rel (0) target = $region5
  $region4: #{tile.23} parent=0 // pred_region
    _
  $region5: #{tile.23} parent=0 // pred_fallthru
    _
  %v4 = vld [vmem:[%s0] ss:$0 sm:$0xff]
  %5 = vst [vmem:[%s1] sm:$0xff] %v4
  %s6 = scalar_lea.vmem %s1, 8
  %7 = vst [vmem:[%s6] sm:$0xff] %v4

// kernel: tile.24
$region0: #{tile.24}
  %s0 = inlined_call_operand.vmem [shape: f32[16,8], index: 0, kind: input, shape index: {}]
  %s1 = inlined_call_operand.vmem [shape: f32[1,128], index: 1, kind: output, shape index: {}]
  $region1: #{tile.24} parent=0
    #allocation0 [shape = 'u8[4096]{0}', space=vmem, size = 0x1000, scoped, tag = 'scoped mem for output reshape']
    %v2 = vld [vmem:[%s0] sm:$0x1]
    %vm3 = vcmask 64512
    %4 = vst.msk [vmem:[#allocation0] sm:$0x1] %vm3, %v2
    %s5 = scalar_lea.vmem %s0, 15
    %v6 = vld [vmem:[%s5] sm:$0x1]
    %7 = vrot.lane.b32.xlu0 %v6, 120
    %v8 = vpop.permute.xlu0 %7
    %vm9 = vcmask 1048512
    %10 = vst.msk [vmem:[#allocation0] sm:$0x1] %vm9, %v8
    %s11 = scalar_lea.vmem %s0, 14
    %v12 = vld [vmem:[%s11] sm:$0x1]
    %13 = vrot.lane.b32.xlu0 %v12, 112
    %v14 = vpop.permute.xlu0 %13
    %vm15 = vcmask 982912
    %16 = vst.msk [vmem:[#allocation0] sm:$0x1] %vm15, %v14
    %s17 = scalar_lea.vmem %s0, 13
    %v18 = vld [vmem:[%s17] sm:$0x1]
    %19 = vrot.lane.b32.xlu0 %v18, 104
    %v20 = vpop.permute.xlu0 %19
    %vm21 = vcmask 917312
    %22 = vst.msk [vmem:[#allocation0] sm:$0x1] %vm21, %v20
    %s23 = scalar_lea.vmem %s0, 12
    %v24 = vld [vmem:[%s23] sm:$0x1]
    %25 = vrot.lane.b32.xlu0 %v24, 96
    %v26 = vpop.permute.xlu0 %25
    %vm27 = vcmask 851712
    %28 = vst.msk [vmem:[#allocation0] sm:$0x1] %vm27, %v26
    %s29 = scalar_lea.vmem %s0, 11
    %v30 = vld [vmem:[%s29] sm:$0x1]
    %31 = vrot.lane.b32.xlu0 %v30, 88
    %v32 = vpop.permute.xlu0 %31
    %vm33 = vcmask 786112
    %34 = vst.msk [vmem:[#allocation0] sm:$0x1] %vm33, %v32
    %s35 = scalar_lea.vmem %s0, 10
    %v36 = vld [vmem:[%s35] sm:$0x1]
    %37 = vrot.lane.b32.xlu0 %v36, 80
    %v38 = vpop.permute.xlu0 %37
    %vm39 = vcmask 720512
    %40 = vst.msk [vmem:[#allocation0] sm:$0x1] %vm39, %v38
    %s41 = scalar_lea.vmem %s0, 9
    %v42 = vld [vmem:[%s41] sm:$0x1]
    %43 = vrot.lane.b32.xlu0 %v42, 72
    %v44 = vpop.permute.xlu0 %43
    %vm45 = vcmask 654912
    %46 = vst.msk [vmem:[#allocation0] sm:$0x1] %vm45, %v44
    %s47 = scalar_lea.vmem %s0, 8
    %v48 = vld [vmem:[%s47] sm:$0x1]
    %49 = vrot.lane.b32.xlu0 %v48, 64
    %v50 = vpop.permute.xlu0 %49
    %vm51 = vcmask 589312
    %52 = vst.msk [vmem:[#allocation0] sm:$0x1] %vm51, %v50
    %s53 = scalar_lea.vmem %s0, 7
    %v54 = vld [vmem:[%s53] sm:$0x1]
    %55 = vrot.lane.b32.xlu0 %v54, 56
    %v56 = vpop.permute.xlu0 %55
    %vm57 = vcmask 523712
    %58 = vst.msk [vmem:[#allocation0] sm:$0x1] %vm57, %v56
    %s59 = scalar_lea.vmem %s0, 6
    %v60 = vld [vmem:[%s59] sm:$0x1]
    %61 = vrot.lane.b32.xlu0 %v60, 48
    %v62 = vpop.permute.xlu0 %61
    %vm63 = vcmask 458112
    %64 = vst.msk [vmem:[#allocation0] sm:$0x1] %vm63, %v62
    %s65 = scalar_lea.vmem %s0, 5
    %v66 = vld [vmem:[%s65] sm:$0x1]
    %67 = vrot.lane.b32.xlu0 %v66, 40
    %v68 = vpop.permute.xlu0 %67
    %vm69 = vcmask 392512
    %70 = vst.msk [vmem:[#allocation0] sm:$0x1] %vm69, %v68
    %s71 = scalar_lea.vmem %s0, 4
    %v72 = vld [vmem:[%s71] sm:$0x1]
    %73 = vrot.lane.b32.xlu0 %v72, 32
    %v74 = vpop.permute.xlu0 %73
    %vm75 = vcmask 326912
    %76 = vst.msk [vmem:[#allocation0] sm:$0x1] %vm75, %v74
    %s77 = scalar_lea.vmem %s0, 3
    %v78 = vld [vmem:[%s77] sm:$0x1]
    %79 = vrot.lane.b32.xlu0 %v78, 24
    %v80 = vpop.permute.xlu0 %79
    %vm81 = vcmask 261312
    %82 = vst.msk [vmem:[#allocation0] sm:$0x1] %vm81, %v80
    %s83 = scalar_lea.vmem %s0, 2
    %v84 = vld [vmem:[%s83] sm:$0x1]
    %85 = vrot.lane.b32.xlu0 %v84, 16
    %v86 = vpop.permute.xlu0 %85
    %vm87 = vcmask 195712
    %88 = vst.msk [vmem:[#allocation0] sm:$0x1] %vm87, %v86
    %s89 = scalar_lea.vmem %s0, 1
    %v90 = vld [vmem:[%s89] sm:$0x1]
    %91 = vrot.lane.b32.xlu0 %v90, 8
    %v92 = vpop.permute.xlu0 %91
    %vm93 = vcmask 130112
    %94 = vst.msk [vmem:[#allocation0] sm:$0x1] %vm93, %v92
    %s96 = sshllo.u32 0, 1
    %v98 = vld [vmem:[#allocation0] sm:%s96]
    %s99 = sshllo.u32 0, 1
    %100 = vst [vmem:[%s1] sm:%s99] %v98

// kernel: basic_block_pallas.1
$region0: #{basic_block_pallas.1}
  #allocation0 [shape = 'u32[]', space=smem, size = 0x4, offset = 0x4, fixed_abs, tag = 'smem constant byte address 0x4 - core index']
  #allocation1 [shape = 'u32[144,128]{1,0:T(1,128)}', space=vmem, size = 0x12000, scoped, tag = 'internal scratch']
  %s0 = inlined_call_operand.vmem [shape: f32[32,128], index: 0, kind: input, shape index: {}]
  %s1 = inlined_call_operand.vmem [shape: bf16[32,32], index: 1, kind: input, shape index: {}]
  %s2 = inlined_call_operand.vmem [shape: bf16[32,32], index: 2, kind: input, shape index: {}]
  %s3 = inlined_call_operand.vmem [shape: bf16[3,128,128], index: 3, kind: input, shape index: {}]
  %s4 = inlined_call_operand.vmem [shape: f32[1,128], index: 4, kind: input, shape index: {}]
  %s5 = inlined_call_operand.vmem [shape: f32[1,128], index: 5, kind: input, shape index: {}]
  %s6 = inlined_call_operand.vmem [shape: bf16[3,128,128], index: 6, kind: input, shape index: {}]
  %s7 = inlined_call_operand.vmem [shape: f32[1,128], index: 7, kind: input, shape index: {}]
  %s8 = inlined_call_operand.vmem [shape: f32[1,128], index: 8, kind: input, shape index: {}]
  %s9 = inlined_call_operand.vmem [shape: f32[32,128], index: 9, kind: output, shape index: {}]
  %s10 = sld [smem:[#allocation0]]
  $region46: #{basic_block_pallas.1} parent=0
    _
  %s12 = ssub.s32 1, %s10
  %s13 = scalar_select 0, %s12, %s10
  // Predicated region
  $region2: #{basic_block_pallas.1} parent=0 // pred_check
    _
  $region3: #{basic_block_pallas.1} parent=0 // pred_check_branch
    %15 = sbr.rel (0) target = $region5
  $region4: #{basic_block_pallas.1} parent=0 // pred_region
    _
  $region5: #{basic_block_pallas.1} parent=0 // pred_fallthru
    _
  // Predicated region
  $region6: #{basic_block_pallas.1} parent=0 // pred_check
    _
  $region7: #{basic_block_pallas.1} parent=0 // pred_check_branch
    %17 = sbr.rel (0) target = $region9
  $region8: #{basic_block_pallas.1} parent=0 // pred_region
    _
  $region9: #{basic_block_pallas.1} parent=0 // pred_fallthru
    _
  // Predicated region
  $region10: #{basic_block_pallas.1} parent=0 // pred_check
    _
  $region11: #{basic_block_pallas.1} parent=0 // pred_check_branch
    %19 = sbr.rel (0) target = $region13
  $region12: #{basic_block_pallas.1} parent=0 // pred_region
    _
  $region13: #{basic_block_pallas.1} parent=0 // pred_fallthru
    _
  // Predicated region
  $region14: #{basic_block_pallas.1} parent=0 // pred_check
    _
  $region15: #{basic_block_pallas.1} parent=0 // pred_check_branch
    %21 = sbr.rel (0) target = $region17
  $region16: #{basic_block_pallas.1} parent=0 // pred_region
    _
  $region17: #{basic_block_pallas.1} parent=0 // pred_fallthru
    _
  // Predicated region
  $region18: #{basic_block_pallas.1} parent=0 // pred_check
    _
  $region19: #{basic_block_pallas.1} parent=0 // pred_check_branch
    %23 = sbr.rel (0) target = $region21
  $region20: #{basic_block_pallas.1} parent=0 // pred_region
    _
  $region21: #{basic_block_pallas.1} parent=0 // pred_fallthru
    _
  // Predicated region
  $region22: #{basic_block_pallas.1} parent=0 // pred_check
    _
  $region23: #{basic_block_pallas.1} parent=0 // pred_check_branch
    %25 = sbr.rel (0) target = $region25
  $region24: #{basic_block_pallas.1} parent=0 // pred_region
    _
  $region25: #{basic_block_pallas.1} parent=0 // pred_fallthru
    _
  // Predicated region
  $region26: #{basic_block_pallas.1} parent=0 // pred_check
    _
  $region27: #{basic_block_pallas.1} parent=0 // pred_check_branch
    %27 = sbr.rel (0) target = $region29
  $region28: #{basic_block_pallas.1} parent=0 // pred_region
    _
  $region29: #{basic_block_pallas.1} parent=0 // pred_fallthru
    _
  // Predicated region
  $region30: #{basic_block_pallas.1} parent=0 // pred_check
    _
  $region31: #{basic_block_pallas.1} parent=0 // pred_check_branch
    %29 = sbr.rel (0) target = $region33
  $region32: #{basic_block_pallas.1} parent=0 // pred_region
    _
  $region33: #{basic_block_pallas.1} parent=0 // pred_fallthru
    _
  // Predicated region
  $region34: #{basic_block_pallas.1} parent=0 // pred_check
    _
  $region35: #{basic_block_pallas.1} parent=0 // pred_check_branch
    %31 = sbr.rel (0) target = $region37
  $region36: #{basic_block_pallas.1} parent=0 // pred_region
    _
  $region37: #{basic_block_pallas.1} parent=0 // pred_fallthru
    _
  %v33 = vld [vmem:[%s0] sm:$0xff]
  %v34 = vld [vmem:[%s0 + $0x8] sm:$0xff]
  %v35 = vld [vmem:[%s0 + $0x10] sm:$0xff]
  %v36 = vld [vmem:[%s0 + $0x18] sm:$0xff]
  %v37 = vpack.c.bf16 %v34, %v33
  %v38 = vpack.c.bf16 %v36, %v35
  %v39 = vld [vmem:[%s1] sm:$0xf]
  %v40 = vld [vmem:[%s1 + $0x4] sm:$0xf]
  %v41 = vld [vmem:[%s1 + $0x8] sm:$0xf]
  %v42 = vld [vmem:[%s1 + $0xc] sm:$0xf]
  %v43 = vld [vmem:[%s2] sm:$0xf]
  %v44 = vld [vmem:[%s2 + $0x4] sm:$0xf]
  %v45 = vld [vmem:[%s2 + $0x8] sm:$0xf]
  %v46 = vld [vmem:[%s2 + $0xc] sm:$0xf]
  %v51 = vunpack.c.l.b16 %v39
  %v52 = vunpack.c.l.b16 %v40
  %v53 = vunpack.c.l.b16 %v41
  %v54 = vunpack.c.l.b16 %v42
  %v55 = vpack.c.b16 %v52, %v51
  %v56 = vpack.c.b16 %v54, %v53
  %vm57 = vcmask 261120
  %v59 = vsel %vm57, %v55, 0
  %v62 = vsel %vm57, %v56, 0
  %64 = vmatprep.subr.bf16.mxu0 0
  %65 = vmatpush1.bf16.msra.mxu0 %v37
  %66 = vmatprep.subr.bf16.mxu0 0
  %67 = vmatpush1.bf16.msra.mxu0 %v38
  %68 = vmatprep.subr.bf16.mxu0 0
  %69 = vmatpush1.bf16.msra.mxu0 0
  %70 = vmatprep.subr.bf16.mxu0 0
  %71 = vmatpush1.bf16.msra.mxu0 0
  %72 = vmatprep.subr.bf16.mxu0 0
  %73 = vmatpush1.bf16.msra.mxu0 0
  %74 = vmatprep.subr.bf16.mxu0 0
  %75 = vmatpush1.bf16.msra.mxu0 0
  %76 = vmatprep.subr.bf16.mxu0 0
  %77 = vmatpush1.bf16.msra.mxu0 0
  %78 = vmatprep.subr.bf16.mxu0 0
  %79 = vmatpush1.bf16.msra.mxu0 0
  %80 = vmatprep.subr.bf16.mxu0 0
  %81 = vmatpush1.bf16.msra.mxu0 0
  %82 = vmatprep.subr.bf16.mxu0 0
  %83 = vmatpush1.bf16.msra.mxu0 0
  %84 = vmatprep.subr.bf16.mxu0 0
  %85 = vmatpush1.bf16.msra.mxu0 0
  %86 = vmatprep.subr.bf16.mxu0 0
  %87 = vmatpush1.bf16.msra.mxu0 0
  %88 = vmatprep.subr.bf16.mxu0 0
  %89 = vmatpush1.bf16.msra.mxu0 0
  %90 = vmatprep.subr.bf16.mxu0 0
  %91 = vmatpush1.bf16.msra.mxu0 0
  %92 = vmatprep.subr.bf16.mxu0 0
  %93 = vmatpush1.bf16.msra.mxu0 0
  %94 = vmatprep.subr.bf16.mxu0 0
  %95 = vmatpush1.bf16.msra.mxu0 0
  %96 = vmatprep.mubr.bf16.mxu0 0
  %97 = vmatmul.mubr.bf16.gmra.mrb[0].mxu0 %v59
  %v98 = vpop.f32.mrb[0].mxu0
  %v99 = vadd.f32 0.0, %v98
  %v100 = vpop.f32.mrb[0].mxu0
  %v101 = vpop.f32.mrb[0].mxu0
  %v102 = vadd.f32 0.0, %v101
  %v103 = vpop.f32.mrb[0].mxu0
  %104 = vmatprep.mubr.bf16.mxu0 0
  %105 = vmatmul.mubr.bf16.gmra.mrb[0].mxu0 %v62
  %v106 = vpop.f32.mrb[0].mxu0
  %v107 = vadd.f32 0.0, %v106
  %v108 = vpop.f32.mrb[0].mxu0
  %v109 = vpop.f32.mrb[0].mxu0
  %v110 = vadd.f32 0.0, %v109
  %v111 = vpop.f32.mrb[0].mxu0
  %112 = vdwg.mxu0
  %v113 = vpack.c.bf16 %v102, %v99
  %v114 = vpack.c.bf16 %v110, %v107
  %v119 = vunpack.c.l.b16 %v43
  %v120 = vunpack.c.l.b16 %v44
  %v121 = vunpack.c.l.b16 %v45
  %v122 = vunpack.c.l.b16 %v46
  %v123 = vpack.c.b16 %v120, %v119
  %v124 = vpack.c.b16 %v122, %v121
  %v126 = vsel %vm57, %v123, 0
  %v129 = vsel %vm57, %v124, 0
  %131 = vmatprep.subr.bf16.mxu0 0
  %132 = vmatpush1.bf16.msra.mxu0 %v37
  %133 = vmatprep.subr.bf16.mxu0 0
  %134 = vmatpush1.bf16.msra.mxu0 %v38
  %135 = vmatprep.subr.bf16.mxu0 0
  %136 = vmatpush1.bf16.msra.mxu0 0
  %137 = vmatprep.subr.bf16.mxu0 0
  %138 = vmatpush1.bf16.msra.mxu0 0
  %139 = vmatprep.subr.bf16.mxu0 0
  %140 = vmatpush1.bf16.msra.mxu0 0
  %141 = vmatprep.subr.bf16.mxu0 0
  %142 = vmatpush1.bf16.msra.mxu0 0
  %143 = vmatprep.subr.bf16.mxu0 0
  %144 = vmatpush1.bf16.msra.mxu0 0
  %145 = vmatprep.subr.bf16.mxu0 0
  %146 = vmatpush1.bf16.msra.mxu0 0
  %147 = vmatprep.subr.bf16.mxu0 0
  %148 = vmatpush1.bf16.msra.mxu0 0
  %149 = vmatprep.subr.bf16.mxu0 0
  %150 = vmatpush1.bf16.msra.mxu0 0
  %151 = vmatprep.subr.bf16.mxu0 0
  %152 = vmatpush1.bf16.msra.mxu0 0
  %153 = vmatprep.subr.bf16.mxu0 0
  %154 = vmatpush1.bf16.msra.mxu0 0
  %155 = vmatprep.subr.bf16.mxu0 0
  %156 = vmatpush1.bf16.msra.mxu0 0
  %157 = vmatprep.subr.bf16.mxu0 0
  %158 = vmatpush1.bf16.msra.mxu0 0
  %159 = vmatprep.subr.bf16.mxu0 0
  %160 = vmatpush1.bf16.msra.mxu0 0
  %161 = vmatprep.subr.bf16.mxu0 0
  %162 = vmatpush1.bf16.msra.mxu0 0
  %163 = vmatprep.mubr.bf16.mxu0 0
  %164 = vmatmul.mubr.bf16.gmra.mrb[0].mxu0 %v126
  %v165 = vpop.f32.mrb[0].mxu0
  %v166 = vadd.f32 0.0, %v165
  %v167 = vpop.f32.mrb[0].mxu0
  %v168 = vpop.f32.mrb[0].mxu0
  %v169 = vadd.f32 0.0, %v168
  %v170 = vpop.f32.mrb[0].mxu0
  %171 = vmatprep.mubr.bf16.mxu0 0
  %172 = vmatmul.mubr.bf16.gmra.mrb[0].mxu0 %v129
  %v173 = vpop.f32.mrb[0].mxu0
  %v174 = vadd.f32 0.0, %v173
  %v175 = vpop.f32.mrb[0].mxu0
  %v176 = vpop.f32.mrb[0].mxu0
  %v177 = vadd.f32 0.0, %v176
  %v178 = vpop.f32.mrb[0].mxu0
  %179 = vdwg.mxu0
  %v180 = vpack.c.bf16 %v169, %v166
  %v181 = vpack.c.bf16 %v177, %v174
  %v182 = vld [vmem:[%s3] sm:$0xf]
  %v183 = vld [vmem:[%s3 + $0x4] sm:$0xf]
  %v184 = vld [vmem:[%s3 + $0x8] sm:$0xf]
  %v185 = vld [vmem:[%s3 + $0xc] sm:$0xf]
  %v186 = vld [vmem:[%s3 + $0x10] sm:$0xf]
  %v187 = vld [vmem:[%s3 + $0x14] sm:$0xf]
  %v188 = vld [vmem:[%s3 + $0x18] sm:$0xf]
  %v189 = vld [vmem:[%s3 + $0x1c] sm:$0xf]
  %v190 = vld [vmem:[%s3 + $0x20] sm:$0xf]
  %v191 = vld [vmem:[%s3 + $0x24] sm:$0xf]
  %v192 = vld [vmem:[%s3 + $0x28] sm:$0xf]
  %v193 = vld [vmem:[%s3 + $0x2c] sm:$0xf]
  %v194 = vld [vmem:[%s3 + $0x30] sm:$0xf]
  %v195 = vld [vmem:[%s3 + $0x34] sm:$0xf]
  %v196 = vld [vmem:[%s3 + $0x38] sm:$0xf]
  %v197 = vld [vmem:[%s3 + $0x3c] sm:$0xf]
  %s198 = scalar_lea.vmem %s3, 64
  %v199 = vld [vmem:[%s198] sm:$0xf]
  %v200 = vld [vmem:[%s198 + $0x4] sm:$0xf]
  %v201 = vld [vmem:[%s198 + $0x8] sm:$0xf]
  %v202 = vld [vmem:[%s198 + $0xc] sm:$0xf]
  %v203 = vld [vmem:[%s198 + $0x10] sm:$0xf]
  %v204 = vld [vmem:[%s198 + $0x14] sm:$0xf]
  %v205 = vld [vmem:[%s198 + $0x18] sm:$0xf]
  %v206 = vld [vmem:[%s198 + $0x1c] sm:$0xf]
  %v207 = vld [vmem:[%s198 + $0x20] sm:$0xf]
  %v208 = vld [vmem:[%s198 + $0x24] sm:$0xf]
  %v209 = vld [vmem:[%s198 + $0x28] sm:$0xf]
  %v210 = vld [vmem:[%s198 + $0x2c] sm:$0xf]
  %v211 = vld [vmem:[%s198 + $0x30] sm:$0xf]
  %v212 = vld [vmem:[%s198 + $0x34] sm:$0xf]
  %v213 = vld [vmem:[%s198 + $0x38] sm:$0xf]
  %v214 = vld [vmem:[%s198 + $0x3c] sm:$0xf]
  %v231 = vunpack.c.l.b16 %v199
  %v232 = vunpack.c.l.b16 %v200
  %v233 = vunpack.c.l.b16 %v201
  %v234 = vunpack.c.l.b16 %v202
  %v235 = vunpack.c.l.b16 %v203
  %v236 = vunpack.c.l.b16 %v204
  %v237 = vunpack.c.l.b16 %v205
  %v238 = vunpack.c.l.b16 %v206
  %v239 = vunpack.c.l.b16 %v207
  %v240 = vunpack.c.l.b16 %v208
  %v241 = vunpack.c.l.b16 %v209
  %v242 = vunpack.c.l.b16 %v210
  %v243 = vunpack.c.l.b16 %v211
  %v244 = vunpack.c.l.b16 %v212
  %v245 = vunpack.c.l.b16 %v213
  %v246 = vunpack.c.l.b16 %v214
  %v247 = vpack.c.b16 %v232, %v231
  %v248 = vpack.c.b16 %v234, %v233
  %v249 = vpack.c.b16 %v236, %v235
  %v250 = vpack.c.b16 %v238, %v237
  %v251 = vpack.c.b16 %v240, %v239
  %v252 = vpack.c.b16 %v242, %v241
  %v253 = vpack.c.b16 %v244, %v243
  %v254 = vpack.c.b16 %v246, %v245
  %263 = vmatprep.subr.bf16.mxu0 0
  %264 = vmatpush1.bf16.msra.mxu0 %v247
  %265 = vmatprep.subr.bf16.mxu0 0
  %266 = vmatpush1.bf16.msra.mxu0 %v248
  %267 = vmatprep.subr.bf16.mxu0 0
  %268 = vmatpush1.bf16.msra.mxu0 %v249
  %269 = vmatprep.subr.bf16.mxu0 0
  %270 = vmatpush1.bf16.msra.mxu0 %v250
  %271 = vmatprep.subr.bf16.mxu0 0
  %272 = vmatpush1.bf16.msra.mxu0 %v251
  %273 = vmatprep.subr.bf16.mxu0 0
  %274 = vmatpush1.bf16.msra.mxu0 %v252
  %275 = vmatprep.subr.bf16.mxu0 0
  %276 = vmatpush1.bf16.msra.mxu0 %v253
  %277 = vmatprep.subr.bf16.mxu0 0
  %278 = vmatpush1.bf16.msra.mxu0 %v254
  %279 = vmatprep.subr.bf16.mxu0 0
  %280 = vmatpush1.bf16.msra.mxu0 0
  %281 = vmatprep.subr.bf16.mxu0 0
  %282 = vmatpush1.bf16.msra.mxu0 0
  %283 = vmatprep.subr.bf16.mxu0 0
  %284 = vmatpush1.bf16.msra.mxu0 0
  %285 = vmatprep.subr.bf16.mxu0 0
  %286 = vmatpush1.bf16.msra.mxu0 0
  %287 = vmatprep.subr.bf16.mxu0 0
  %288 = vmatpush1.bf16.msra.mxu0 0
  %289 = vmatprep.subr.bf16.mxu0 0
  %290 = vmatpush1.bf16.msra.mxu0 0
  %291 = vmatprep.subr.bf16.mxu0 0
  %292 = vmatpush1.bf16.msra.mxu0 0
  %293 = vmatprep.subr.bf16.mxu0 0
  %294 = vmatpush1.bf16.msra.mxu0 0
  %295 = vmatprep.mubr.bf16.mxu0 0
  %296 = vmatmul.mubr.bf16.gmra.mrb[0].mxu0 %v37
  %v297 = vpop.f32.mrb[0].mxu0
  %v298 = vadd.f32 0.0, %v297
  %v299 = vpop.f32.mrb[0].mxu0
  %v300 = vpop.f32.mrb[0].mxu0
  %v301 = vadd.f32 0.0, %v300
  %v302 = vpop.f32.mrb[0].mxu0
  %303 = vmatprep.mubr.bf16.mxu0 0
  %304 = vmatmul.mubr.bf16.gmra.mrb[0].mxu0 %v38
  %v305 = vpop.f32.mrb[0].mxu0
  %v306 = vadd.f32 0.0, %v305
  %v307 = vpop.f32.mrb[0].mxu0
  %v308 = vpop.f32.mrb[0].mxu0
  %v309 = vadd.f32 0.0, %v308
  %v310 = vpop.f32.mrb[0].mxu0
  %311 = vdwg.mxu0
  %v328 = vunpack.c.l.b16 %v182
  %v329 = vunpack.c.l.b16 %v183
  %v330 = vunpack.c.l.b16 %v184
  %v331 = vunpack.c.l.b16 %v185
  %v332 = vunpack.c.l.b16 %v186
  %v333 = vunpack.c.l.b16 %v187
  %v334 = vunpack.c.l.b16 %v188
  %v335 = vunpack.c.l.b16 %v189
  %v336 = vunpack.c.l.b16 %v190
  %v337 = vunpack.c.l.b16 %v191
  %v338 = vunpack.c.l.b16 %v192
  %v339 = vunpack.c.l.b16 %v193
  %v340 = vunpack.c.l.b16 %v194
  %v341 = vunpack.c.l.b16 %v195
  %v342 = vunpack.c.l.b16 %v196
  %v343 = vunpack.c.l.b16 %v197
  %v344 = vpack.c.b16 %v329, %v328
  %v345 = vpack.c.b16 %v331, %v330
  %v346 = vpack.c.b16 %v333, %v332
  %v347 = vpack.c.b16 %v335, %v334
  %v348 = vpack.c.b16 %v337, %v336
  %v349 = vpack.c.b16 %v339, %v338
  %v350 = vpack.c.b16 %v341, %v340
  %v351 = vpack.c.b16 %v343, %v342
  %360 = vmatprep.subr.bf16.mxu0 0
  %361 = vmatpush1.bf16.msra.mxu0 %v344
  %362 = vmatprep.subr.bf16.mxu0 0
  %363 = vmatpush1.bf16.msra.mxu0 %v345
  %364 = vmatprep.subr.bf16.mxu0 0
  %365 = vmatpush1.bf16.msra.mxu0 %v346
  %366 = vmatprep.subr.bf16.mxu0 0
  %367 = vmatpush1.bf16.msra.mxu0 %v347
  %368 = vmatprep.subr.bf16.mxu0 0
  %369 = vmatpush1.bf16.msra.mxu0 %v348
  %370 = vmatprep.subr.bf16.mxu0 0
  %371 = vmatpush1.bf16.msra.mxu0 %v349
  %372 = vmatprep.subr.bf16.mxu0 0
  %373 = vmatpush1.bf16.msra.mxu0 %v350
  %374 = vmatprep.subr.bf16.mxu0 0
  %375 = vmatpush1.bf16.msra.mxu0 %v351
  %376 = vmatprep.subr.bf16.mxu0 0
  %377 = vmatpush1.bf16.msra.mxu0 0
  %378 = vmatprep.subr.bf16.mxu0 0
  %379 = vmatpush1.bf16.msra.mxu0 0
  %380 = vmatprep.subr.bf16.mxu0 0
  %381 = vmatpush1.bf16.msra.mxu0 0
  %382 = vmatprep.subr.bf16.mxu0 0
  %383 = vmatpush1.bf16.msra.mxu0 0
  %384 = vmatprep.subr.bf16.mxu0 0
  %385 = vmatpush1.bf16.msra.mxu0 0
  %386 = vmatprep.subr.bf16.mxu0 0
  %387 = vmatpush1.bf16.msra.mxu0 0
  %388 = vmatprep.subr.bf16.mxu0 0
  %389 = vmatpush1.bf16.msra.mxu0 0
  %390 = vmatprep.subr.bf16.mxu0 0
  %391 = vmatpush1.bf16.msra.mxu0 0
  %392 = vmatprep.mubr.bf16.mxu0 0
  %393 = vmatmul.mubr.bf16.gmra.mrb[0].mxu0 %v113
  %v394 = vpop.f32.mrb[0].mxu0
  %v395 = vadd.f32 %v298, %v394
  %v396 = vpop.f32.mrb[0].mxu0
  %v397 = vpop.f32.mrb[0].mxu0
  %v398 = vadd.f32 %v301, %v397
  %v399 = vpop.f32.mrb[0].mxu0
  %400 = vmatprep.mubr.bf16.mxu0 0
  %401 = vmatmul.mubr.bf16.gmra.mrb[0].mxu0 %v114
  %v402 = vpop.f32.mrb[0].mxu0
  %v403 = vadd.f32 %v306, %v402
  %v404 = vpop.f32.mrb[0].mxu0
  %v405 = vpop.f32.mrb[0].mxu0
  %v406 = vadd.f32 %v309, %v405
  %v407 = vpop.f32.mrb[0].mxu0
  %408 = vdwg.mxu0
  %s409 = scalar_lea.vmem %s3, 128
  %v410 = vld [vmem:[%s409] sm:$0xf]
  %v411 = vld [vmem:[%s409 + $0x4] sm:$0xf]
  %v412 = vld [vmem:[%s409 + $0x8] sm:$0xf]
  %v413 = vld [vmem:[%s409 + $0xc] sm:$0xf]
  %v414 = vld [vmem:[%s409 + $0x10] sm:$0xf]
  %v415 = vld [vmem:[%s409 + $0x14] sm:$0xf]
  %v416 = vld [vmem:[%s409 + $0x18] sm:$0xf]
  %v417 = vld [vmem:[%s409 + $0x1c] sm:$0xf]
  %v418 = vld [vmem:[%s409 + $0x20] sm:$0xf]
  %v419 = vld [vmem:[%s409 + $0x24] sm:$0xf]
  %v420 = vld [vmem:[%s409 + $0x28] sm:$0xf]
  %v421 = vld [vmem:[%s409 + $0x2c] sm:$0xf]
  %v422 = vld [vmem:[%s409 + $0x30] sm:$0xf]
  %v423 = vld [vmem:[%s409 + $0x34] sm:$0xf]
  %v424 = vld [vmem:[%s409 + $0x38] sm:$0xf]
  %v425 = vld [vmem:[%s409 + $0x3c] sm:$0xf]
  %v442 = vunpack.c.l.b16 %v410
  %v443 = vunpack.c.l.b16 %v411
  %v444 = vunpack.c.l.b16 %v412
  %v445 = vunpack.c.l.b16 %v413
  %v446 = vunpack.c.l.b16 %v414
  %v447 = vunpack.c.l.b16 %v415
  %v448 = vunpack.c.l.b16 %v416
  %v449 = vunpack.c.l.b16 %v417
  %v450 = vunpack.c.l.b16 %v418
  %v451 = vunpack.c.l.b16 %v419
  %v452 = vunpack.c.l.b16 %v420
  %v453 = vunpack.c.l.b16 %v421
  %v454 = vunpack.c.l.b16 %v422
  %v455 = vunpack.c.l.b16 %v423
  %v456 = vunpack.c.l.b16 %v424
  %v457 = vunpack.c.l.b16 %v425
  %v458 = vpack.c.b16 %v443, %v442
  %v459 = vpack.c.b16 %v445, %v444
  %v460 = vpack.c.b16 %v447, %v446
  %v461 = vpack.c.b16 %v449, %v448
  %v462 = vpack.c.b16 %v451, %v450
  %v463 = vpack.c.b16 %v453, %v452
  %v464 = vpack.c.b16 %v455, %v454
  %v465 = vpack.c.b16 %v457, %v456
  %474 = vmatprep.subr.bf16.mxu0 0
  %475 = vmatpush1.bf16.msra.mxu0 %v458
  %476 = vmatprep.subr.bf16.mxu0 0
  %477 = vmatpush1.bf16.msra.mxu0 %v459
  %478 = vmatprep.subr.bf16.mxu0 0
  %479 = vmatpush1.bf16.msra.mxu0 %v460
  %480 = vmatprep.subr.bf16.mxu0 0
  %481 = vmatpush1.bf16.msra.mxu0 %v461
  %482 = vmatprep.subr.bf16.mxu0 0
  %483 = vmatpush1.bf16.msra.mxu0 %v462
  %484 = vmatprep.subr.bf16.mxu0 0
  %485 = vmatpush1.bf16.msra.mxu0 %v463
  %486 = vmatprep.subr.bf16.mxu0 0
  %487 = vmatpush1.bf16.msra.mxu0 %v464
  %488 = vmatprep.subr.bf16.mxu0 0
  %489 = vmatpush1.bf16.msra.mxu0 %v465
  %490 = vmatprep.subr.bf16.mxu0 0
  %491 = vmatpush1.bf16.msra.mxu0 0
  %492 = vmatprep.subr.bf16.mxu0 0
  %493 = vmatpush1.bf16.msra.mxu0 0
  %494 = vmatprep.subr.bf16.mxu0 0
  %495 = vmatpush1.bf16.msra.mxu0 0
  %496 = vmatprep.subr.bf16.mxu0 0
  %497 = vmatpush1.bf16.msra.mxu0 0
  %498 = vmatprep.subr.bf16.mxu0 0
  %499 = vmatpush1.bf16.msra.mxu0 0
  %500 = vmatprep.subr.bf16.mxu0 0
  %501 = vmatpush1.bf16.msra.mxu0 0
  %502 = vmatprep.subr.bf16.mxu0 0
  %503 = vmatpush1.bf16.msra.mxu0 0
  %504 = vmatprep.subr.bf16.mxu0 0
  %505 = vmatpush1.bf16.msra.mxu0 0
  %506 = vmatprep.mubr.bf16.mxu0 0
  %507 = vmatmul.mubr.bf16.gmra.mrb[0].mxu0 %v180
  %v508 = vpop.f32.mrb[0].mxu0
  %v509 = vadd.f32 0.0, %v508
  %v510 = vpop.f32.mrb[0].mxu0
  %v511 = vpop.f32.mrb[0].mxu0
  %v512 = vadd.f32 0.0, %v511
  %v513 = vpop.f32.mrb[0].mxu0
  %514 = vmatprep.mubr.bf16.mxu0 0
  %515 = vmatmul.mubr.bf16.gmra.mrb[0].mxu0 %v181
  %v516 = vpop.f32.mrb[0].mxu0
  %v517 = vadd.f32 0.0, %v516
  %v518 = vpop.f32.mrb[0].mxu0
  %v519 = vpop.f32.mrb[0].mxu0
  %v520 = vadd.f32 0.0, %v519
  %v521 = vpop.f32.mrb[0].mxu0
  %522 = vdwg.mxu0
  %v523 = vadd.f32 %v395, %v509
  %v524 = vadd.f32 %v398, %v512
  %v525 = vadd.f32 %v403, %v517
  %v526 = vadd.f32 %v406, %v520
  %v527 = vld [vmem:[%s4] sm:$0x1]
  %v529 = vlaneseq
  %v530 = vshrl.u32 %v529, 7
  %v531 = vsub.s32 0, %v530
  %v532 = vrot.slane %v527, %v531
  %v534 = vmul.f32 %v523, %v532
  %v535 = vmul.f32 %v524, %v532
  %v536 = vmul.f32 %v525, %v532
  %v537 = vmul.f32 %v526, %v532
  %v538 = vld [vmem:[%s5] sm:$0x1]
  %v540 = vlaneseq
  %v541 = vshrl.u32 %v540, 7
  %v542 = vsub.s32 0, %v541
  %v543 = vrot.slane %v538, %v542
  %v545 = vadd.f32 %v534, %v543
  %v546 = vadd.f32 %v535, %v543
  %v547 = vadd.f32 %v536, %v543
  %v548 = vadd.f32 %v537, %v543
  %v549 = vmax.f32 %v545, 0.0
  %v550 = vmax.f32 %v546, 0.0
  %v551 = vmax.f32 %v547, 0.0
  %v552 = vmax.f32 %v548, 0.0
  %v553 = vpack.c.bf16 %v550, %v549
  %v554 = vpack.c.bf16 %v552, %v551
  %555 = vmatprep.subr.bf16.mxu0 0
  %556 = vmatpush1.bf16.msra.mxu0 %v553
  %557 = vmatprep.subr.bf16.mxu0 0
  %558 = vmatpush1.bf16.msra.mxu0 %v554
  %559 = vmatprep.subr.bf16.mxu0 0
  %560 = vmatpush1.bf16.msra.mxu0 0
  %561 = vmatprep.subr.bf16.mxu0 0
  %562 = vmatpush1.bf16.msra.mxu0 0
  %563 = vmatprep.subr.bf16.mxu0 0
  %564 = vmatpush1.bf16.msra.mxu0 0
  %565 = vmatprep.subr.bf16.mxu0 0
  %566 = vmatpush1.bf16.msra.mxu0 0
  %567 = vmatprep.subr.bf16.mxu0 0
  %568 = vmatpush1.bf16.msra.mxu0 0
  %569 = vmatprep.subr.bf16.mxu0 0
  %570 = vmatpush1.bf16.msra.mxu0 0
  %571 = vmatprep.subr.bf16.mxu0 0
  %572 = vmatpush1.bf16.msra.mxu0 0
  %573 = vmatprep.subr.bf16.mxu0 0
  %574 = vmatpush1.bf16.msra.mxu0 0
  %575 = vmatprep.subr.bf16.mxu0 0
  %576 = vmatpush1.bf16.msra.mxu0 0
  %577 = vmatprep.subr.bf16.mxu0 0
  %578 = vmatpush1.bf16.msra.mxu0 0
  %579 = vmatprep.subr.bf16.mxu0 0
  %580 = vmatpush1.bf16.msra.mxu0 0
  %581 = vmatprep.subr.bf16.mxu0 0
  %582 = vmatpush1.bf16.msra.mxu0 0
  %583 = vmatprep.subr.bf16.mxu0 0
  %584 = vmatpush1.bf16.msra.mxu0 0
  %585 = vmatprep.subr.bf16.mxu0 0
  %586 = vmatpush1.bf16.msra.mxu0 0
  %587 = vmatprep.mubr.bf16.mxu0 0
  %588 = vmatmul.mubr.bf16.gmra.mrb[0].mxu0 %v59
  %v589 = vpop.f32.mrb[0].mxu0
  %v590 = vadd.f32 0.0, %v589
  %v591 = vpop.f32.mrb[0].mxu0
  %v592 = vpop.f32.mrb[0].mxu0
  %v593 = vadd.f32 0.0, %v592
  %v594 = vpop.f32.mrb[0].mxu0
  %595 = vmatprep.mubr.bf16.mxu0 0
  %596 = vmatmul.mubr.bf16.gmra.mrb[0].mxu0 %v62
  %v597 = vpop.f32.mrb[0].mxu0
  %v598 = vadd.f32 0.0, %v597
  %v599 = vpop.f32.mrb[0].mxu0
  %v600 = vpop.f32.mrb[0].mxu0
  %v601 = vadd.f32 0.0, %v600
  %v602 = vpop.f32.mrb[0].mxu0
  %603 = vdwg.mxu0
  %v604 = vpack.c.bf16 %v593, %v590
  %v605 = vpack.c.bf16 %v601, %v598
  %606 = vmatprep.subr.bf16.mxu0 0
  %607 = vmatpush1.bf16.msra.mxu0 %v553
  %608 = vmatprep.subr.bf16.mxu0 0
  %609 = vmatpush1.bf16.msra.mxu0 %v554
  %610 = vmatprep.subr.bf16.mxu0 0
  %611 = vmatpush1.bf16.msra.mxu0 0
  %612 = vmatprep.subr.bf16.mxu0 0
  %613 = vmatpush1.bf16.msra.mxu0 0
  %614 = vmatprep.subr.bf16.mxu0 0
  %615 = vmatpush1.bf16.msra.mxu0 0
  %616 = vmatprep.subr.bf16.mxu0 0
  %617 = vmatpush1.bf16.msra.mxu0 0
  %618 = vmatprep.subr.bf16.mxu0 0
  %619 = vmatpush1.bf16.msra.mxu0 0
  %620 = vmatprep.subr.bf16.mxu0 0
  %621 = vmatpush1.bf16.msra.mxu0 0
  %622 = vmatprep.subr.bf16.mxu0 0
  %623 = vmatpush1.bf16.msra.mxu0 0
  %624 = vmatprep.subr.bf16.mxu0 0
  %625 = vmatpush1.bf16.msra.mxu0 0
  %626 = vmatprep.subr.bf16.mxu0 0
  %627 = vmatpush1.bf16.msra.mxu0 0
  %628 = vmatprep.subr.bf16.mxu0 0
  %629 = vmatpush1.bf16.msra.mxu0 0
  %630 = vmatprep.subr.bf16.mxu0 0
  %631 = vmatpush1.bf16.msra.mxu0 0
  %632 = vmatprep.subr.bf16.mxu0 0
  %633 = vmatpush1.bf16.msra.mxu0 0
  %634 = vmatprep.subr.bf16.mxu0 0
  %635 = vmatpush1.bf16.msra.mxu0 0
  %636 = vmatprep.subr.bf16.mxu0 0
  %637 = vmatpush1.bf16.msra.mxu0 0
  %638 = vmatprep.mubr.bf16.mxu0 0
  %639 = vmatmul.mubr.bf16.gmra.mrb[0].mxu0 %v126
  %v640 = vpop.f32.mrb[0].mxu0
  %v641 = vadd.f32 0.0, %v640
  %v642 = vpop.f32.mrb[0].mxu0
  %v643 = vpop.f32.mrb[0].mxu0
  %v644 = vadd.f32 0.0, %v643
  %v645 = vpop.f32.mrb[0].mxu0
  %646 = vmatprep.mubr.bf16.mxu0 0
  %647 = vmatmul.mubr.bf16.gmra.mrb[0].mxu0 %v129
  %v648 = vpop.f32.mrb[0].mxu0
  %v649 = vadd.f32 0.0, %v648
  %v650 = vpop.f32.mrb[0].mxu0
  %v651 = vpop.f32.mrb[0].mxu0
  %v652 = vadd.f32 0.0, %v651
  %v653 = vpop.f32.mrb[0].mxu0
  %654 = vdwg.mxu0
  %v655 = vpack.c.bf16 %v644, %v641
  %v656 = vpack.c.bf16 %v652, %v649
  %v657 = vld [vmem:[%s6] sm:$0xf]
  %v658 = vld [vmem:[%s6 + $0x4] sm:$0xf]
  %v659 = vld [vmem:[%s6 + $0x8] sm:$0xf]
  %v660 = vld [vmem:[%s6 + $0xc] sm:$0xf]
  %v661 = vld [vmem:[%s6 + $0x10] sm:$0xf]
  %v662 = vld [vmem:[%s6 + $0x14] sm:$0xf]
  %v663 = vld [vmem:[%s6 + $0x18] sm:$0xf]
  %v664 = vld [vmem:[%s6 + $0x1c] sm:$0xf]
  %v665 = vld [vmem:[%s6 + $0x20] sm:$0xf]
  %v666 = vld [vmem:[%s6 + $0x24] sm:$0xf]
  %v667 = vld [vmem:[%s6 + $0x28] sm:$0xf]
  %v668 = vld [vmem:[%s6 + $0x2c] sm:$0xf]
  %v669 = vld [vmem:[%s6 + $0x30] sm:$0xf]
  %v670 = vld [vmem:[%s6 + $0x34] sm:$0xf]
  %v671 = vld [vmem:[%s6 + $0x38] sm:$0xf]
  %v672 = vld [vmem:[%s6 + $0x3c] sm:$0xf]
  %s673 = scalar_lea.vmem %s6, 64
  %v674 = vld [vmem:[%s673] sm:$0xf]
  %v675 = vld [vmem:[%s673 + $0x4] sm:$0xf]
  %v676 = vld [vmem:[%s673 + $0x8] sm:$0xf]
  %v677 = vld [vmem:[%s673 + $0xc] sm:$0xf]
  %v678 = vld [vmem:[%s673 + $0x10] sm:$0xf]
  %v679 = vld [vmem:[%s673 + $0x14] sm:$0xf]
  %v680 = vld [vmem:[%s673 + $0x18] sm:$0xf]
  %v681 = vld [vmem:[%s673 + $0x1c] sm:$0xf]
  %v682 = vld [vmem:[%s673 + $0x20] sm:$0xf]
  %v683 = vld [vmem:[%s673 + $0x24] sm:$0xf]
  %v684 = vld [vmem:[%s673 + $0x28] sm:$0xf]
  %v685 = vld [vmem:[%s673 + $0x2c] sm:$0xf]
  %v686 = vld [vmem:[%s673 + $0x30] sm:$0xf]
  %v687 = vld [vmem:[%s673 + $0x34] sm:$0xf]
  %v688 = vld [vmem:[%s673 + $0x38] sm:$0xf]
  %v689 = vld [vmem:[%s673 + $0x3c] sm:$0xf]
  %v706 = vunpack.c.l.b16 %v674
  %v707 = vunpack.c.l.b16 %v675
  %v708 = vunpack.c.l.b16 %v676
  %v709 = vunpack.c.l.b16 %v677
  %v710 = vunpack.c.l.b16 %v678
  %v711 = vunpack.c.l.b16 %v679
  %v712 = vunpack.c.l.b16 %v680
  %v713 = vunpack.c.l.b16 %v681
  %v714 = vunpack.c.l.b16 %v682
  %v715 = vunpack.c.l.b16 %v683
  %v716 = vunpack.c.l.b16 %v684
  %v717 = vunpack.c.l.b16 %v685
  %v718 = vunpack.c.l.b16 %v686
  %v719 = vunpack.c.l.b16 %v687
  %v720 = vunpack.c.l.b16 %v688
  %v721 = vunpack.c.l.b16 %v689
  %v722 = vpack.c.b16 %v707, %v706
  %v723 = vpack.c.b16 %v709, %v708
  %v724 = vpack.c.b16 %v711, %v710
  %v725 = vpack.c.b16 %v713, %v712
  %v726 = vpack.c.b16 %v715, %v714
  %v727 = vpack.c.b16 %v717, %v716
  %v728 = vpack.c.b16 %v719, %v718
  %v729 = vpack.c.b16 %v721, %v720
  %738 = vmatprep.subr.bf16.mxu0 0
  %739 = vmatpush1.bf16.msra.mxu0 %v722
  %740 = vmatprep.subr.bf16.mxu0 0
  %741 = vmatpush1.bf16.msra.mxu0 %v723
  %742 = vmatprep.subr.bf16.mxu0 0
  %743 = vmatpush1.bf16.msra.mxu0 %v724
  %744 = vmatprep.subr.bf16.mxu0 0
  %745 = vmatpush1.bf16.msra.mxu0 %v725
  %746 = vmatprep.subr.bf16.mxu0 0
  %747 = vmatpush1.bf16.msra.mxu0 %v726
  %748 = vmatprep.subr.bf16.mxu0 0
  %749 = vmatpush1.bf16.msra.mxu0 %v727
  %750 = vmatprep.subr.bf16.mxu0 0
  %751 = vmatpush1.bf16.msra.mxu0 %v728
  %752 = vmatprep.subr.bf16.mxu0 0
  %753 = vmatpush1.bf16.msra.mxu0 %v729
  %754 = vmatprep.subr.bf16.mxu0 0
  %755 = vmatpush1.bf16.msra.mxu0 0
  %756 = vmatprep.subr.bf16.mxu0 0
  %757 = vmatpush1.bf16.msra.mxu0 0
  %758 = vmatprep.subr.bf16.mxu0 0
  %759 = vmatpush1.bf16.msra.mxu0 0
  %760 = vmatprep.subr.bf16.mxu0 0
  %761 = vmatpush1.bf16.msra.mxu0 0
  %762 = vmatprep.subr.bf16.mxu0 0
  %763 = vmatpush1.bf16.msra.mxu0 0
  %764 = vmatprep.subr.bf16.mxu0 0
  %765 = vmatpush1.bf16.msra.mxu0 0
  %766 = vmatprep.subr.bf16.mxu0 0
  %767 = vmatpush1.bf16.msra.mxu0 0
  %768 = vmatprep.subr.bf16.mxu0 0
  %769 = vmatpush1.bf16.msra.mxu0 0
  %770 = vmatprep.mubr.bf16.mxu0 0
  %771 = vmatmul.mubr.bf16.gmra.mrb[0].mxu0 %v553
  %v772 = vpop.f32.mrb[0].mxu0
  %v773 = vadd.f32 0.0, %v772
  %v774 = vpop.f32.mrb[0].mxu0
  %v775 = vpop.f32.mrb[0].mxu0
  %v776 = vadd.f32 0.0, %v775
  %v777 = vpop.f32.mrb[0].mxu0
  %778 = vmatprep.mubr.bf16.mxu0 0
  %779 = vmatmul.mubr.bf16.gmra.mrb[0].mxu0 %v554
  %v780 = vpop.f32.mrb[0].mxu0
  %v781 = vadd.f32 0.0, %v780
  %v782 = vpop.f32.mrb[0].mxu0
  %v783 = vpop.f32.mrb[0].mxu0
  %v784 = vadd.f32 0.0, %v783
  %v785 = vpop.f32.mrb[0].mxu0
  %786 = vdwg.mxu0
  %v803 = vunpack.c.l.b16 %v657
  %v804 = vunpack.c.l.b16 %v658
  %v805 = vunpack.c.l.b16 %v659
  %v806 = vunpack.c.l.b16 %v660
  %v807 = vunpack.c.l.b16 %v661
  %v808 = vunpack.c.l.b16 %v662
  %v809 = vunpack.c.l.b16 %v663
  %v810 = vunpack.c.l.b16 %v664
  %v811 = vunpack.c.l.b16 %v665
  %v812 = vunpack.c.l.b16 %v666
  %v813 = vunpack.c.l.b16 %v667
  %v814 = vunpack.c.l.b16 %v668
  %v815 = vunpack.c.l.b16 %v669
  %v816 = vunpack.c.l.b16 %v670
  %v817 = vunpack.c.l.b16 %v671
  %v818 = vunpack.c.l.b16 %v672
  %v819 = vpack.c.b16 %v804, %v803
  %v820 = vpack.c.b16 %v806, %v805
  %v821 = vpack.c.b16 %v808, %v807
  %v822 = vpack.c.b16 %v810, %v809
  %v823 = vpack.c.b16 %v812, %v811
  %v824 = vpack.c.b16 %v814, %v813
  %v825 = vpack.c.b16 %v816, %v815
  %v826 = vpack.c.b16 %v818, %v817
  %835 = vmatprep.subr.bf16.mxu0 0
  %836 = vmatpush1.bf16.msra.mxu0 %v819
  %837 = vmatprep.subr.bf16.mxu0 0
  %838 = vmatpush1.bf16.msra.mxu0 %v820
  %839 = vmatprep.subr.bf16.mxu0 0
  %840 = vmatpush1.bf16.msra.mxu0 %v821
  %841 = vmatprep.subr.bf16.mxu0 0
  %842 = vmatpush1.bf16.msra.mxu0 %v822
  %843 = vmatprep.subr.bf16.mxu0 0
  %844 = vmatpush1.bf16.msra.mxu0 %v823
  %845 = vmatprep.subr.bf16.mxu0 0
  %846 = vmatpush1.bf16.msra.mxu0 %v824
  %847 = vmatprep.subr.bf16.mxu0 0
  %848 = vmatpush1.bf16.msra.mxu0 %v825
  %849 = vmatprep.subr.bf16.mxu0 0
  %850 = vmatpush1.bf16.msra.mxu0 %v826
  %851 = vmatprep.subr.bf16.mxu0 0
  %852 = vmatpush1.bf16.msra.mxu0 0
  %853 = vmatprep.subr.bf16.mxu0 0
  %854 = vmatpush1.bf16.msra.mxu0 0
  %855 = vmatprep.subr.bf16.mxu0 0
  %856 = vmatpush1.bf16.msra.mxu0 0
  %857 = vmatprep.subr.bf16.mxu0 0
  %858 = vmatpush1.bf16.msra.mxu0 0
  %859 = vmatprep.subr.bf16.mxu0 0
  %860 = vmatpush1.bf16.msra.mxu0 0
  %861 = vmatprep.subr.bf16.mxu0 0
  %862 = vmatpush1.bf16.msra.mxu0 0
  %863 = vmatprep.subr.bf16.mxu0 0
  %864 = vmatpush1.bf16.msra.mxu0 0
  %865 = vmatprep.subr.bf16.mxu0 0
  %866 = vmatpush1.bf16.msra.mxu0 0
  %867 = vmatprep.mubr.bf16.mxu0 0
  %868 = vmatmul.mubr.bf16.gmra.mrb[0].mxu0 %v604
  %v869 = vpop.f32.mrb[0].mxu0
  %v870 = vadd.f32 %v773, %v869
  %v871 = vpop.f32.mrb[0].mxu0
  %v872 = vpop.f32.mrb[0].mxu0
  %v873 = vadd.f32 %v776, %v872
  %v874 = vpop.f32.mrb[0].mxu0
  %875 = vmatprep.mubr.bf16.mxu0 0
  %876 = vmatmul.mubr.bf16.gmra.mrb[0].mxu0 %v605
  %v877 = vpop.f32.mrb[0].mxu0
  %v878 = vadd.f32 %v781, %v877
  %v879 = vpop.f32.mrb[0].mxu0
  %v880 = vpop.f32.mrb[0].mxu0
  %v881 = vadd.f32 %v784, %v880
  %v882 = vpop.f32.mrb[0].mxu0
  %883 = vdwg.mxu0
  %s884 = scalar_lea.vmem %s6, 128
  %v885 = vld [vmem:[%s884] sm:$0xf]
  %v886 = vld [vmem:[%s884 + $0x4] sm:$0xf]
  %v887 = vld [vmem:[%s884 + $0x8] sm:$0xf]
  %v888 = vld [vmem:[%s884 + $0xc] sm:$0xf]
  %v889 = vld [vmem:[%s884 + $0x10] sm:$0xf]
  %v890 = vld [vmem:[%s884 + $0x14] sm:$0xf]
  %v891 = vld [vmem:[%s884 + $0x18] sm:$0xf]
  %v892 = vld [vmem:[%s884 + $0x1c] sm:$0xf]
  %v893 = vld [vmem:[%s884 + $0x20] sm:$0xf]
  %v894 = vld [vmem:[%s884 + $0x24] sm:$0xf]
  %v895 = vld [vmem:[%s884 + $0x28] sm:$0xf]
  %v896 = vld [vmem:[%s884 + $0x2c] sm:$0xf]
  %v897 = vld [vmem:[%s884 + $0x30] sm:$0xf]
  %v898 = vld [vmem:[%s884 + $0x34] sm:$0xf]
  %v899 = vld [vmem:[%s884 + $0x38] sm:$0xf]
  %v900 = vld [vmem:[%s884 + $0x3c] sm:$0xf]
  %v917 = vunpack.c.l.b16 %v885
  %v918 = vunpack.c.l.b16 %v886
  %v919 = vunpack.c.l.b16 %v887
  %v920 = vunpack.c.l.b16 %v888
  %v921 = vunpack.c.l.b16 %v889
  %v922 = vunpack.c.l.b16 %v890
  %v923 = vunpack.c.l.b16 %v891
  %v924 = vunpack.c.l.b16 %v892
  %v925 = vunpack.c.l.b16 %v893
  %v926 = vunpack.c.l.b16 %v894
  %v927 = vunpack.c.l.b16 %v895
  %v928 = vunpack.c.l.b16 %v896
  %v929 = vunpack.c.l.b16 %v897
  %v930 = vunpack.c.l.b16 %v898
  %v931 = vunpack.c.l.b16 %v899
  %v932 = vunpack.c.l.b16 %v900
  %v933 = vpack.c.b16 %v918, %v917
  %v934 = vpack.c.b16 %v920, %v919
  %v935 = vpack.c.b16 %v922, %v921
  %v936 = vpack.c.b16 %v924, %v923
  %v937 = vpack.c.b16 %v926, %v925
  %v938 = vpack.c.b16 %v928, %v927
  %v939 = vpack.c.b16 %v930, %v929
  %v940 = vpack.c.b16 %v932, %v931
  %949 = vmatprep.subr.bf16.mxu0 0
  %950 = vmatpush1.bf16.msra.mxu0 %v933
  %951 = vmatprep.subr.bf16.mxu0 0
  %952 = vmatpush1.bf16.msra.mxu0 %v934
  %953 = vmatprep.subr.bf16.mxu0 0
  %954 = vmatpush1.bf16.msra.mxu0 %v935
  %955 = vmatprep.subr.bf16.mxu0 0
  %956 = vmatpush1.bf16.msra.mxu0 %v936
  %957 = vmatprep.subr.bf16.mxu0 0
  %958 = vmatpush1.bf16.msra.mxu0 %v937
  %959 = vmatprep.subr.bf16.mxu0 0
  %960 = vmatpush1.bf16.msra.mxu0 %v938
  %961 = vmatprep.subr.bf16.mxu0 0
  %962 = vmatpush1.bf16.msra.mxu0 %v939
  %963 = vmatprep.subr.bf16.mxu0 0
  %964 = vmatpush1.bf16.msra.mxu0 %v940
  %965 = vmatprep.subr.bf16.mxu0 0
  %966 = vmatpush1.bf16.msra.mxu0 0
  %967 = vmatprep.subr.bf16.mxu0 0
  %968 = vmatpush1.bf16.msra.mxu0 0
  %969 = vmatprep.subr.bf16.mxu0 0
  %970 = vmatpush1.bf16.msra.mxu0 0
  %971 = vmatprep.subr.bf16.mxu0 0
  %972 = vmatpush1.bf16.msra.mxu0 0
  %973 = vmatprep.subr.bf16.mxu0 0
  %974 = vmatpush1.bf16.msra.mxu0 0
  %975 = vmatprep.subr.bf16.mxu0 0
  %976 = vmatpush1.bf16.msra.mxu0 0
  %977 = vmatprep.subr.bf16.mxu0 0
  %978 = vmatpush1.bf16.msra.mxu0 0
  %979 = vmatprep.subr.bf16.mxu0 0
  %980 = vmatpush1.bf16.msra.mxu0 0
  %981 = vmatprep.mubr.bf16.mxu0 0
  %982 = vmatmul.mubr.bf16.gmra.mrb[0].mxu0 %v655
  %v983 = vpop.f32.mrb[0].mxu0
  %v984 = vadd.f32 0.0, %v983
  %v985 = vpop.f32.mrb[0].mxu0
  %v986 = vpop.f32.mrb[0].mxu0
  %v987 = vadd.f32 0.0, %v986
  %v988 = vpop.f32.mrb[0].mxu0
  %989 = vmatprep.mubr.bf16.mxu0 0
  %990 = vmatmul.mubr.bf16.gmra.mrb[0].mxu0 %v656
  %v991 = vpop.f32.mrb[0].mxu0
  %v992 = vadd.f32 0.0, %v991
  %v993 = vpop.f32.mrb[0].mxu0
  %v994 = vpop.f32.mrb[0].mxu0
  %v995 = vadd.f32 0.0, %v994
  %v996 = vpop.f32.mrb[0].mxu0
  %997 = vdwg.mxu0
  %v998 = vadd.f32 %v870, %v984
  %v999 = vadd.f32 %v873, %v987
  %v1000 = vadd.f32 %v878, %v992
  %v1001 = vadd.f32 %v881, %v995
  %v1002 = vld [vmem:[%s7] sm:$0x1]
  %v1004 = vlaneseq
  %v1005 = vshrl.u32 %v1004, 7
  %v1006 = vsub.s32 0, %v1005
  %v1007 = vrot.slane %v1002, %v1006
  %v1009 = vmul.f32 %v998, %v1007
  %v1010 = vmul.f32 %v999, %v1007
  %v1011 = vmul.f32 %v1000, %v1007
  %v1012 = vmul.f32 %v1001, %v1007
  %v1013 = vld [vmem:[%s8] sm:$0x1]
  %v1015 = vlaneseq
  %v1016 = vshrl.u32 %v1015, 7
  %v1017 = vsub.s32 0, %v1016
  %v1018 = vrot.slane %v1013, %v1017
  %v1020 = vadd.f32 %v1009, %v1018
  %v1021 = vadd.f32 %v1010, %v1018
  %v1022 = vadd.f32 %v1011, %v1018
  %v1023 = vadd.f32 %v1012, %v1018
  %v1024 = vadd.f32 %v1020, %v33
  %v1025 = vadd.f32 %v1021, %v34
  %v1026 = vadd.f32 %v1022, %v35
  %v1027 = vadd.f32 %v1023, %v36
  %v1028 = vmax.f32 %v1024, 0.0
  %v1029 = vmax.f32 %v1025, 0.0
  %v1030 = vmax.f32 %v1026, 0.0
  %v1031 = vmax.f32 %v1027, 0.0
  %1032 = vst [vmem:[%s9] sm:$0xff] %v1028
  %1033 = vst [vmem:[%s9 + $0x8] sm:$0xff] %v1029
  %1034 = vst [vmem:[%s9 + $0x10] sm:$0xff] %v1030
  %1035 = vst [vmem:[%s9 + $0x18] sm:$0xff] %v1031
  // Predicated region
  $region38: #{basic_block_pallas.1} parent=0 // pred_check
    _
  $region39: #{basic_block_pallas.1} parent=0 // pred_check_branch
    %1037 = sbr.rel (0) target = $region41
  $region40: #{basic_block_pallas.1} parent=0 // pred_region
    _
  $region41: #{basic_block_pallas.1} parent=0 // pred_fallthru
    _
  // Predicated region
  $region42: #{basic_block_pallas.1} parent=0 // pred_check
    _
  $region43: #{basic_block_pallas.1} parent=0 // pred_check_branch
    %1039 = sbr.rel (0) target = $region45
  $region44: #{basic_block_pallas.1} parent=0 // pred_region
    _
  $region45: #{basic_block_pallas.1} parent=0 // pred_fallthru
    _

</llo_original>
